<compile_context>
chip_gen: v7x
topology: tpu7x:2x2x1
jax: 0.10.0
libtpu: 0.0.40
codegen_flags: <defaults>
</compile_context>

<pallas_src>
import functools

import jax
import jax.numpy as jnp
from jax.experimental import pallas as pl
from jax.experimental.pallas import tpu as pltpu


def _round_up(x: int, m: int) -> int:
    return (x + m - 1) // m * m


def _mlp_kernel(x_ref, w1_ref, b1_ref, w2_ref, b2_ref, w3_ref, b3_ref, o_ref,
                *, real_residual: bool, compute_dtype):
    # x kept in f32 for the residual / epilogue; cast only for the MXU.
    x_f32 = x_ref[...].astype(jnp.float32)
    x = x_f32.astype(compute_dtype)

    # layer 1: embed_dim -> hidden, ReLU
    h = jnp.dot(x, w1_ref[...], preferred_element_type=jnp.float32) + b1_ref[...]
    h = jnp.maximum(h, 0.0).astype(compute_dtype)

    # layer 2: hidden -> hidden, ReLU
    h = jnp.dot(h, w2_ref[...], preferred_element_type=jnp.float32) + b2_ref[...]
    h = jnp.maximum(h, 0.0).astype(compute_dtype)

    # layer 3: hidden -> embed_dim (no activation); fold b3 into the residual
    # epilogue (single f32 add chain).
    calibrated = jnp.dot(h, w3_ref[...], preferred_element_type=jnp.float32)

    out = x_f32 + calibrated + b3_ref[...]
    if not real_residual:
        out = 0.5 * out
    o_ref[...] = out.astype(o_ref.dtype)


def prepare_params(params, compute_dtype=jnp.bfloat16):
    """One-time parameter prep (do this OUTSIDE the per-call path).

    Matmul weights are cast to the MXU compute dtype; biases stay f32 and are
    reshaped to (1, dim) rows.  Cast order matches reference_forward exactly.
    """
    return {
        "w1": params["w1"].astype(compute_dtype),
        "w2": params["w2"].astype(compute_dtype),
        "w3": params["w3"].astype(compute_dtype),
        "b1": params["b1"].astype(jnp.float32).reshape(1, -1),
        "b2": params["b2"].astype(jnp.float32).reshape(1, -1),
        "b3": params["b3"].astype(jnp.float32).reshape(1, -1),
    }


def prediction_net_forward(prototype, prepared, *,
                           use_real_residual_connections, tile_n=512):
    """prototype: (N, embed_dim).  prepared: output of prepare_params()."""
    n, d = prototype.shape
    dh = prepared["w1"].shape[1]
    compute_dtype = prepared["w1"].dtype

    # Row-tile selection: multiple of 8 (sublane), capped near n, and split so
    # the row grid has >= 2 steps when possible (v7x megacore sharding).
    tile_n = max(8, min(int(tile_n), _round_up(n, 8)))
    if n > 8 and pl.cdiv(n, tile_n) < 2:
        tile_n = _round_up(pl.cdiv(n, 2), 8)
    tile_n = _round_up(tile_n, 8)
    grid_n = pl.cdiv(n, tile_n)

    # Explicit VMEM budget: resident weights/biases + double-buffered x/out
    # tiles + activation headroom, clamped to [32 MiB, 64 MiB] (v7x physical).
    w_itemsize = jnp.dtype(compute_dtype).itemsize
    x_itemsize = jnp.dtype(prototype.dtype).itemsize
    w_bytes = (d * dh + dh * dh + dh * d) * w_itemsize
    b_bytes = (2 * dh + d) * 4
    io_bytes = 2 * tile_n * d * x_itemsize          # one x tile + one out tile
    act_bytes = 3 * tile_n * dh * 4                 # f32 intermediates
    needed = 2 * (w_bytes + b_bytes + io_bytes) + act_bytes
    vmem_limit = int(min(64 << 20, max(32 << 20, 2 * needed)))

    # Advisory cost so XLA can overlap surrounding ops with the custom call.
    cost = pl.CostEstimate(
        flops=2 * n * (d * dh + dh * dh + dh * d),
        transcendentals=0,
        bytes_accessed=2 * n * d * x_itemsize + w_bytes + b_bytes,
    )

    kernel = functools.partial(_mlp_kernel,
                               real_residual=use_real_residual_connections,
                               compute_dtype=compute_dtype)

    full = lambda i: (0, 0)
    out = pl.pallas_call(
        kernel,
        out_shape=jax.ShapeDtypeStruct((n, d), prototype.dtype),
        grid_spec=pltpu.PrefetchScalarGridSpec(
            num_scalar_prefetch=0,
            grid=(grid_n,),
            in_specs=[
                pl.BlockSpec((tile_n, d), lambda i: (i, 0)),  # prototype rows
                pl.BlockSpec((d, dh), full),                  # w1 (resident)
                pl.BlockSpec((1, dh), full),                  # b1
                pl.BlockSpec((dh, dh), full),                 # w2 (resident)
                pl.BlockSpec((1, dh), full),                  # b2
                pl.BlockSpec((dh, d), full),                  # w3 (resident)
                pl.BlockSpec((1, d), full),                   # b3
            ],
            out_specs=pl.BlockSpec((tile_n, d), lambda i: (i, 0)),
        ),
        compiler_params=pltpu.CompilerParams(
            dimension_semantics=("parallel",),
            vmem_limit_bytes=vmem_limit),
        cost_estimate=cost,
    )(prototype, prepared["w1"], prepared["b1"], prepared["w2"],
      prepared["b2"], prepared["w3"], prepared["b3"])

    return out


def init_params(key, embed_dim, hidden, bias=True):
    ks = jax.random.split(key, 6)
    scale1 = 1.0 / jnp.sqrt(embed_dim)
    scale2 = 1.0 / jnp.sqrt(hidden)
    params = {
        "w1": jax.random.uniform(ks[0], (embed_dim, hidden), jnp.float32,
                                 -scale1, scale1),
        "w2": jax.random.uniform(ks[1], (hidden, hidden), jnp.float32,
                                 -scale2, scale2),
        "w3": jax.random.uniform(ks[2], (hidden, embed_dim), jnp.float32,
                                 -scale2, scale2),
    }
    if bias:
        params["b1"] = jax.random.uniform(ks[3], (hidden,), jnp.float32,
                                          -scale1, scale1)
        params["b2"] = jax.random.uniform(ks[4], (hidden,), jnp.float32,
                                          -scale2, scale2)
        params["b3"] = jax.random.uniform(ks[5], (embed_dim,), jnp.float32,
                                          -scale2, scale2)
    else:
        params["b1"] = jnp.zeros((hidden,), jnp.float32)
        params["b2"] = jnp.zeros((hidden,), jnp.float32)
        params["b3"] = jnp.zeros((embed_dim,), jnp.float32)
    return params


def reference_forward(prototype, params, use_real_residual_connections,
                      compute_dtype=jnp.bfloat16):
    """Pure-JAX reference mirroring the kernel's numerics (bf16 MXU, f32 acc)."""
    x_f32 = prototype.astype(jnp.float32)
    x = x_f32.astype(compute_dtype)
    w1 = params["w1"].astype(compute_dtype)
    w2 = params["w2"].astype(compute_dtype)
    w3 = params["w3"].astype(compute_dtype)
    h = jnp.maximum(jnp.dot(x, w1, preferred_element_type=jnp.float32)
                    + params["b1"], 0.0).astype(compute_dtype)
    h = jnp.maximum(jnp.dot(h, w2, preferred_element_type=jnp.float32)
                    + params["b2"], 0.0).astype(compute_dtype)
    calibrated = (jnp.dot(h, w3, preferred_element_type=jnp.float32)
                  + params["b3"])
    if use_real_residual_connections:
        return (x_f32 + calibrated).astype(prototype.dtype)
    return (0.5 * (x_f32 + calibrated)).astype(prototype.dtype)


if __name__ == "__main__":
    embed_dim = 32          # embed_dim
    hidden = 64             # size_hidden_layer

    key = jax.random.PRNGKey(0)
    k_x, k_p = jax.random.split(key)
    params = init_params(k_p, embed_dim, hidden, bias=True)

    # One-time parameter preparation (outside the per-call path).
    prepared_bf16 = prepare_params(params, compute_dtype=jnp.bfloat16)
    prepared_f32 = prepare_params(params, compute_dtype=jnp.float32)

    # Case 1: ragged batch (N not a multiple of the tile), bf16 MXU, real
    # residual connections.  Exercises the masked last row block + 2-step grid.
    n1 = 20
    proto1 = jax.random.normal(k_x, (n1, embed_dim), jnp.float32)
    out1 = prediction_net_forward(
        proto1, prepared_bf16, use_real_residual_connections=True)
    out1 = jax.block_until_ready(out1)
    ref1 = reference_forward(proto1, params, True, compute_dtype=jnp.bfloat16)
    assert out1.shape == (n1, embed_dim)
    assert jnp.allclose(out1, ref1, atol=2e-3, rtol=2e-3)

    # Case 2: multi-step row grid, f32 compute, averaged residual.
    n2 = 16
    proto2 = jax.random.normal(jax.random.PRNGKey(1), (n2, embed_dim),
                               jnp.float32)
    out2 = prediction_net_forward(
        proto2, prepared_f32, use_real_residual_connections=False)
    out2 = jax.block_until_ready(out2)
    ref2 = reference_forward(proto2, params, False, compute_dtype=jnp.float32)
    assert out2.shape == (n2, embed_dim)
    assert jnp.allclose(out2, ref2, atol=1e-4, rtol=1e-4)

    print("KERNEL_OK")
</pallas_src>

<mosaic_0001>
module attributes {stable_mosaic.version = 11 : i64} {
  func.func @_mlp_kernel(%arg0: i32, %arg1: memref<16x32xf32, #tpu.memory_space<vmem>>, %arg2: memref<32x64xbf16, #tpu.memory_space<vmem>>, %arg3: memref<1x64xf32, #tpu.memory_space<vmem>>, %arg4: memref<64x64xbf16, #tpu.memory_space<vmem>>, %arg5: memref<1x64xf32, #tpu.memory_space<vmem>>, %arg6: memref<64x32xbf16, #tpu.memory_space<vmem>>, %arg7: memref<1x32xf32, #tpu.memory_space<vmem>>, %arg8: memref<16x32xf32, #tpu.memory_space<vmem>>) attributes {dimension_semantics = [#tpu.dimension_semantics<parallel>], iteration_bounds = array<i64: 2>, scalar_prefetch = 0 : i64, scratch_operands = 0 : i64, tpu.core_type = #tpu.core_type<tc>, window_params = [{transform_indices = @transform_0, window_bounds = array<i64: 16, 32>}, {pipeline_mode = #tpu.pipeline_mode<synchronous>, transform_indices = @transform_1, window_bounds = array<i64: 32, 64>}, {pipeline_mode = #tpu.pipeline_mode<synchronous>, transform_indices = @transform_2, window_bounds = array<i64: 1, 64>}, {pipeline_mode = #tpu.pipeline_mode<synchronous>, transform_indices = @transform_3, window_bounds = array<i64: 64, 64>}, {pipeline_mode = #tpu.pipeline_mode<synchronous>, transform_indices = @transform_4, window_bounds = array<i64: 1, 64>}, {pipeline_mode = #tpu.pipeline_mode<synchronous>, transform_indices = @transform_5, window_bounds = array<i64: 64, 32>}, {pipeline_mode = #tpu.pipeline_mode<synchronous>, transform_indices = @transform_6, window_bounds = array<i64: 1, 32>}, {transform_indices = @transform_7, window_bounds = array<i64: 16, 32>}]} {
    %c0 = arith.constant 0 : index
    %c0_0 = arith.constant 0 : index
    %0 = vector.load %arg1[%c0, %c0_0] : memref<16x32xf32, #tpu.memory_space<vmem>>, vector<16x32xf32>
    %1 = arith.truncf %0 : vector<16x32xf32> to vector<16x32xbf16>
    %c0_1 = arith.constant 0 : index
    %c0_2 = arith.constant 0 : index
    %2 = vector.load %arg2[%c0_1, %c0_2] : memref<32x64xbf16, #tpu.memory_space<vmem>>, vector<32x64xbf16>
    %cst = arith.constant dense<0.000000e+00> : vector<16x64xf32>
    %3 = tpu.matmul %1, %2, %cst {dimension_numbers = #tpu.dot_dimension_numbers<[1], [0], [0], [1], [0, 0, 1, 1], [], []>} : vector<16x32xbf16>, vector<32x64xbf16>, vector<16x64xf32> -> vector<16x64xf32>
    %c0_3 = arith.constant 0 : index
    %c0_4 = arith.constant 0 : index
    %4 = vector.load %arg3[%c0_3, %c0_4] : memref<1x64xf32, #tpu.memory_space<vmem>>, vector<1x64xf32>
    %5 = vector.broadcast %4 : vector<1x64xf32> to vector<16x64xf32>
    %6 = arith.addf %3, %5 : vector<16x64xf32>
    %cst_5 = arith.constant 0.000000e+00 : f32
    %7 = vector.broadcast %cst_5 : f32 to vector<16x64xf32>
    %8 = arith.maximumf %6, %7 : vector<16x64xf32>
    %9 = arith.truncf %8 : vector<16x64xf32> to vector<16x64xbf16>
    %c0_6 = arith.constant 0 : index
    %c0_7 = arith.constant 0 : index
    %10 = vector.load %arg4[%c0_6, %c0_7] : memref<64x64xbf16, #tpu.memory_space<vmem>>, vector<64x64xbf16>
    %cst_8 = arith.constant dense<0.000000e+00> : vector<16x64xf32>
    %11 = tpu.matmul %9, %10, %cst_8 {dimension_numbers = #tpu.dot_dimension_numbers<[1], [0], [0], [1], [0, 0, 1, 1], [], []>} : vector<16x64xbf16>, vector<64x64xbf16>, vector<16x64xf32> -> vector<16x64xf32>
    %c0_9 = arith.constant 0 : index
    %c0_10 = arith.constant 0 : index
    %12 = vector.load %arg5[%c0_9, %c0_10] : memref<1x64xf32, #tpu.memory_space<vmem>>, vector<1x64xf32>
    %13 = vector.broadcast %12 : vector<1x64xf32> to vector<16x64xf32>
    %14 = arith.addf %11, %13 : vector<16x64xf32>
    %cst_11 = arith.constant 0.000000e+00 : f32
    %15 = vector.broadcast %cst_11 : f32 to vector<16x64xf32>
    %16 = arith.maximumf %14, %15 : vector<16x64xf32>
    %17 = arith.truncf %16 : vector<16x64xf32> to vector<16x64xbf16>
    %c0_12 = arith.constant 0 : index
    %c0_13 = arith.constant 0 : index
    %18 = vector.load %arg6[%c0_12, %c0_13] : memref<64x32xbf16, #tpu.memory_space<vmem>>, vector<64x32xbf16>
    %cst_14 = arith.constant dense<0.000000e+00> : vector<16x32xf32>
    %19 = tpu.matmul %17, %18, %cst_14 {dimension_numbers = #tpu.dot_dimension_numbers<[1], [0], [0], [1], [0, 0, 1, 1], [], []>} : vector<16x64xbf16>, vector<64x32xbf16>, vector<16x32xf32> -> vector<16x32xf32>
    %20 = arith.addf %0, %19 : vector<16x32xf32>
    %c0_15 = arith.constant 0 : index
    %c0_16 = arith.constant 0 : index
    %21 = vector.load %arg7[%c0_15, %c0_16] : memref<1x32xf32, #tpu.memory_space<vmem>>, vector<1x32xf32>
    %22 = vector.broadcast %21 : vector<1x32xf32> to vector<16x32xf32>
    %23 = arith.addf %20, %22 : vector<16x32xf32>
    %c0_17 = arith.constant 0 : index
    %c0_18 = arith.constant 0 : index
    %24 = vector.load %arg8[%c0_17, %c0_18] : memref<16x32xf32, #tpu.memory_space<vmem>>, vector<16x32xf32>
    tpu.vector_store %arg8[%c0_17, %c0_18], %23 {strides = array<i32>} : memref<16x32xf32, #tpu.memory_space<vmem>>, vector<16x32xf32>,
    return
  }
  func.func @transform_0(%arg0: i32) -> (i32, i32) {
    %c0_i32 = arith.constant 0 : i32
    %c0_i32_0 = arith.constant 0 : i32
    return %arg0, %c0_i32 : i32, i32
  }
  func.func @transform_1(%arg0: i32) -> (i32, i32) {
    %c0_i32 = arith.constant 0 : i32
    %c0_i32_0 = arith.constant 0 : i32
    %c0_i32_1 = arith.constant 0 : i32
    return %c0_i32, %c0_i32_0 : i32, i32
  }
  func.func @transform_2(%arg0: i32) -> (i32, i32) {
    %c0_i32 = arith.constant 0 : i32
    %c0_i32_0 = arith.constant 0 : i32
    %c0_i32_1 = arith.constant 0 : i32
    return %c0_i32, %c0_i32_0 : i32, i32
  }
  func.func @transform_3(%arg0: i32) -> (i32, i32) {
    %c0_i32 = arith.constant 0 : i32
    %c0_i32_0 = arith.constant 0 : i32
    %c0_i32_1 = arith.constant 0 : i32
    return %c0_i32, %c0_i32_0 : i32, i32
  }
  func.func @transform_4(%arg0: i32) -> (i32, i32) {
    %c0_i32 = arith.constant 0 : i32
    %c0_i32_0 = arith.constant 0 : i32
    %c0_i32_1 = arith.constant 0 : i32
    return %c0_i32, %c0_i32_0 : i32, i32
  }
  func.func @transform_5(%arg0: i32) -> (i32, i32) {
    %c0_i32 = arith.constant 0 : i32
    %c0_i32_0 = arith.constant 0 : i32
    %c0_i32_1 = arith.constant 0 : i32
    return %c0_i32, %c0_i32_0 : i32, i32
  }
  func.func @transform_6(%arg0: i32) -> (i32, i32) {
    %c0_i32 = arith.constant 0 : i32
    %c0_i32_0 = arith.constant 0 : i32
    %c0_i32_1 = arith.constant 0 : i32
    return %c0_i32, %c0_i32_0 : i32, i32
  }
  func.func @transform_7(%arg0: i32) -> (i32, i32) {
    %c0_i32 = arith.constant 0 : i32
    %c0_i32_0 = arith.constant 0 : i32
    return %arg0, %c0_i32 : i32, i32
  }
}

</mosaic_0001>

<llo_original>
// kernel: tpu_custom_call.1
$region0: #{tpu_custom_call.1}
  #allocation0 [shape = 'u32[]', space=smem, size = 0x4, offset = 0x4, fixed_abs, tag = 'smem constant byte address 0x4 - core index']
  #allocation1 [shape = 'u32[144,128]{1,0:T(1,128)}', space=vmem, size = 0x12000, scoped, tag = 'internal scratch']
  %s0 = inlined_call_operand.vmem [shape: f32[20,32], index: 0, kind: input, shape index: {}]
  %s1 = inlined_call_operand.hbm [shape: bf16[32,64], index: 1, kind: input, shape index: {}]
  %s2 = inlined_call_operand.vmem [shape: f32[1,64], index: 2, kind: input, shape index: {}]
  %s3 = inlined_call_operand.vmem [shape: bf16[64,64], index: 3, kind: input, shape index: {}]
  %s4 = inlined_call_operand.vmem [shape: f32[1,64], index: 4, kind: input, shape index: {}]
  %s5 = inlined_call_operand.vmem [shape: bf16[64,32], index: 5, kind: input, shape index: {}]
  %s6 = inlined_call_operand.vmem [shape: f32[1,32], index: 6, kind: input, shape index: {}]
  %s7 = inlined_call_operand.hbm [shape: f32[20,32], index: 7, kind: output, shape index: {}]
  %s8 = sld [smem:[#allocation0]]
  $region65: #{tpu_custom_call.1} parent=0
    _
  %s10 = ssub.s32 1, %s8
  %s11 = scalar_select 0, %s10, %s8
  $region1: #{tpu_custom_call.1} parent=0
    #allocation2 [shape = 'u8[8192]{0}', space=vmem, size = 0x2000, scoped, tag = 'input window, operand 1, single buffered']
    #allocation3 [shape = 's32[2]{0}', space=sflag, size = 0x8, scoped, tag = 'scoped memory for tpu_custom_call.1']
    #allocation4 [shape = 's32[2]{0}', space=sflag, size = 0x8, scoped, tag = 'scoped memory for tpu_custom_call.1']
    #allocation5 [shape = 'u8[16384]{0}', space=vmem, size = 0x4000, scoped, tag = 'output window, operand 0']
    %12 = vsyncpa [#allocation3], 0
    %13 = vsyncpa [#allocation4], 0
    %s14 = scalar_lea.sflag [#allocation4], 1
    %15 = vsyncpa %s14, 0
    loop: start=0, step=1, limit=4
    $region2: #{tpu_custom_call.1} parent=1 // loop_pre_header
      _
    $region3: #{tpu_custom_call.1} parent=1 // loop_header
      %s17 = sphi 0, %s21
      %p18 = scmp.ge.s32.totalorder %s17, 4
      %s27 = sphi 0, %s29
      %s30 = sphi 0, %s27
      %s31 = sphi 0, %s30
      %s47 = sphi 0, %s31
      %s51 = sphi 0, %s51
      %s53 = sphi 0, %s51
      %s54 = sphi 0, %s53
      %s68 = sphi 0, %s54
      %s72 = sphi 0, %s72
      %s74 = sphi 0, %s72
      %s75 = sphi 0, %s74
      %s89 = sphi 0, %s75
      %s93 = sphi 0, %s93
      %s95 = sphi 0, %s93
      %s96 = sphi 0, %s95
      %s110 = sphi 0, %s96
      %s114 = sphi 0, %s114
      %s116 = sphi 0, %s114
      %s117 = sphi 0, %s116
      %s131 = sphi 0, %s117
      %s135 = sphi 0, %s135
      %s137 = sphi 0, %s135
      %s138 = sphi 0, %s137
      %s152 = sphi 0, %s138
      %s156 = sphi 0, %s156
      %s158 = sphi 0, %s156
      %s159 = sphi 0, %s158
      %s173 = sphi 0, %s159
      %s179 = sphi 0, %s181
      %s182 = sphi 0, %s179
      %s183 = sphi 0, %s182
      %s199 = sphi 0, %s183
    $region4: #{tpu_custom_call.1} parent=1 // loop_header_branch
      %20 = sbr.rel (%p18) target = $region8
    $region5: #{tpu_custom_call.1} parent=1 // loop_body
      %s22 = ssub.s32 %s17, 1
      %s23 = ssub.s32 %s17, 2
      %s24 = sadd.s32 %s17, 1
      %s25 = ssub.s32 %s17, %s24
      %p26 = scmp.eq.s32.totalorder %s25, 0
      %s28 = sadd.s32 %s27, 1
      %s29 = scalar_select %p26, %s27, %s28
      %p32 = pneg %p26
      %p33 = scmp.eq.s32.totalorder %s17, 1
      %p34 = por %p32, %p33
      %p35 = scmp.ne.s32.totalorder %s27, %s30
      %p36 = scmp.eq.s32.totalorder %s17, 0
      %p37 = por %p35, %p36
      %p38 = scmp.ne.s32.totalorder %s27, %s30
      %p39 = scmp.eq.s32.totalorder %s22, 1
      %p40 = por %p38, %p39
      %p41 = scmp.ne.s32.totalorder %s30, %s31
      %p42 = scmp.eq.s32.totalorder %s22, 0
      %p43 = por %p41, %p42
      %p44 = scmp.ne.s32.totalorder %s30, %s31
      %p45 = scmp.eq.s32.totalorder %s23, 1
      %p46 = por %p44, %p45
      %p48 = scmp.ne.s32.totalorder %s31, %s47
      %p49 = scmp.eq.s32.totalorder %s23, 0
      %p50 = por %p48, %p49
      %s52 = sadd.s32 %s51, 1
      %p55 = scmp.eq.s32.totalorder %s17, 1
      %p56 = scmp.ne.s32.totalorder %s51, %s53
      %p57 = scmp.eq.s32.totalorder %s17, 0
      %p58 = por %p56, %p57
      %p59 = scmp.ne.s32.totalorder %s51, %s53
      %p60 = scmp.eq.s32.totalorder %s22, 1
      %p61 = por %p59, %p60
      %p62 = scmp.ne.s32.totalorder %s53, %s54
      %p63 = scmp.eq.s32.totalorder %s22, 0
      %p64 = por %p62, %p63
      %p65 = scmp.ne.s32.totalorder %s53, %s54
      %p66 = scmp.eq.s32.totalorder %s23, 1
      %p67 = por %p65, %p66
      %p69 = scmp.ne.s32.totalorder %s54, %s68
      %p70 = scmp.eq.s32.totalorder %s23, 0
      %p71 = por %p69, %p70
      %s73 = sadd.s32 %s72, 1
      %p76 = scmp.eq.s32.totalorder %s17, 1
      %p77 = scmp.ne.s32.totalorder %s72, %s74
      %p78 = scmp.eq.s32.totalorder %s17, 0
      %p79 = por %p77, %p78
      %p80 = scmp.ne.s32.totalorder %s72, %s74
      %p81 = scmp.eq.s32.totalorder %s22, 1
      %p82 = por %p80, %p81
      %p83 = scmp.ne.s32.totalorder %s74, %s75
      %p84 = scmp.eq.s32.totalorder %s22, 0
      %p85 = por %p83, %p84
      %p86 = scmp.ne.s32.totalorder %s74, %s75
      %p87 = scmp.eq.s32.totalorder %s23, 1
      %p88 = por %p86, %p87
      %p90 = scmp.ne.s32.totalorder %s75, %s89
      %p91 = scmp.eq.s32.totalorder %s23, 0
      %p92 = por %p90, %p91
      %s94 = sadd.s32 %s93, 1
      %p97 = scmp.eq.s32.totalorder %s17, 1
      %p98 = scmp.ne.s32.totalorder %s93, %s95
      %p99 = scmp.eq.s32.totalorder %s17, 0
      %p100 = por %p98, %p99
      %p101 = scmp.ne.s32.totalorder %s93, %s95
      %p102 = scmp.eq.s32.totalorder %s22, 1
      %p103 = por %p101, %p102
      %p104 = scmp.ne.s32.totalorder %s95, %s96
      %p105 = scmp.eq.s32.totalorder %s22, 0
      %p106 = por %p104, %p105
      %p107 = scmp.ne.s32.totalorder %s95, %s96
      %p108 = scmp.eq.s32.totalorder %s23, 1
      %p109 = por %p107, %p108
      %p111 = scmp.ne.s32.totalorder %s96, %s110
      %p112 = scmp.eq.s32.totalorder %s23, 0
      %p113 = por %p111, %p112
      %s115 = sadd.s32 %s114, 1
      %p118 = scmp.eq.s32.totalorder %s17, 1
      %p119 = scmp.ne.s32.totalorder %s114, %s116
      %p120 = scmp.eq.s32.totalorder %s17, 0
      %p121 = por %p119, %p120
      %p122 = scmp.ne.s32.totalorder %s114, %s116
      %p123 = scmp.eq.s32.totalorder %s22, 1
      %p124 = por %p122, %p123
      %p125 = scmp.ne.s32.totalorder %s116, %s117
      %p126 = scmp.eq.s32.totalorder %s22, 0
      %p127 = por %p125, %p126
      %p128 = scmp.ne.s32.totalorder %s116, %s117
      %p129 = scmp.eq.s32.totalorder %s23, 1
      %p130 = por %p128, %p129
      %p132 = scmp.ne.s32.totalorder %s117, %s131
      %p133 = scmp.eq.s32.totalorder %s23, 0
      %p134 = por %p132, %p133
      %s136 = sadd.s32 %s135, 1
      %p139 = scmp.eq.s32.totalorder %s17, 1
      %p140 = scmp.ne.s32.totalorder %s135, %s137
      %p141 = scmp.eq.s32.totalorder %s17, 0
      %p142 = por %p140, %p141
      %p143 = scmp.ne.s32.totalorder %s135, %s137
      %p144 = scmp.eq.s32.totalorder %s22, 1
      %p145 = por %p143, %p144
      %p146 = scmp.ne.s32.totalorder %s137, %s138
      %p147 = scmp.eq.s32.totalorder %s22, 0
      %p148 = por %p146, %p147
      %p149 = scmp.ne.s32.totalorder %s137, %s138
      %p150 = scmp.eq.s32.totalorder %s23, 1
      %p151 = por %p149, %p150
      %p153 = scmp.ne.s32.totalorder %s138, %s152
      %p154 = scmp.eq.s32.totalorder %s23, 0
      %p155 = por %p153, %p154
      %s157 = sadd.s32 %s156, 1
      %p160 = scmp.eq.s32.totalorder %s17, 1
      %p161 = scmp.ne.s32.totalorder %s156, %s158
      %p162 = scmp.eq.s32.totalorder %s17, 0
      %p163 = por %p161, %p162
      %p164 = scmp.ne.s32.totalorder %s156, %s158
      %p165 = scmp.eq.s32.totalorder %s22, 1
      %p166 = por %p164, %p165
      %p167 = scmp.ne.s32.totalorder %s158, %s159
      %p168 = scmp.eq.s32.totalorder %s22, 0
      %p169 = por %p167, %p168
      %p170 = scmp.ne.s32.totalorder %s158, %s159
      %p171 = scmp.eq.s32.totalorder %s23, 1
      %p172 = por %p170, %p171
      %p174 = scmp.ne.s32.totalorder %s159, %s173
      %p175 = scmp.eq.s32.totalorder %s23, 0
      %p176 = por %p174, %p175
      %s177 = ssub.s32 %s17, %s24
      %p178 = scmp.eq.s32.totalorder %s177, 0
      %s180 = sadd.s32 %s179, 1
      %s181 = scalar_select %p178, %s179, %s180
      %p184 = pneg %p178
      %p185 = scmp.eq.s32.totalorder %s17, 1
      %p186 = por %p184, %p185
      %p187 = scmp.ne.s32.totalorder %s179, %s182
      %p188 = scmp.eq.s32.totalorder %s17, 0
      %p189 = por %p187, %p188
      %p190 = scmp.ne.s32.totalorder %s179, %s182
      %p191 = scmp.eq.s32.totalorder %s22, 1
      %p192 = por %p190, %p191
      %p193 = scmp.ne.s32.totalorder %s182, %s183
      %p194 = scmp.eq.s32.totalorder %s22, 0
      %p195 = por %p193, %p194
      %p196 = scmp.ne.s32.totalorder %s182, %s183
      %p197 = scmp.eq.s32.totalorder %s23, 1
      %p198 = por %p196, %p197
      %p200 = scmp.ne.s32.totalorder %s183, %s199
      %p201 = scmp.eq.s32.totalorder %s23, 0
      %p202 = por %p200, %p201
      %p203 = scmp.le.s32.totalorder 1, %s17
      %p204 = scmp.lt.s32.totalorder %s17, 3
      %p205 = pnand %p203, %p204
      %p206 = pneg %p205
      // Predicated region
      $region9: #{tpu_custom_call.1} parent=5 // pred_check
        _
      $region10: #{tpu_custom_call.1} parent=5 // pred_check_branch
        %208 = sbr.rel (%p205) target = $region12
      $region11: #{tpu_custom_call.1} parent=5 // pred_region
        %s209 = ssub.s32 %s17, 1
        // Predicated region
        $region13: #{tpu_custom_call.1} parent=11 // pred_check
          %p210 = pneg %p64
        $region14: #{tpu_custom_call.1} parent=11 // pred_check_branch
          %212 = sbr.rel (%p210) target = $region16
        $region15: #{tpu_custom_call.1} parent=11 // pred_region
          %s214 = ssub.s32 256, 256
          %215 = vsyncadd [#allocation3], %s214
          %s216 = sshll.u32 [#allocation2], 4
          %s217 = int_to_ptr.vmem [resolvable:$true] %s216
          %222 = dma.hbm_to_vmem [thread:$0]  %s1, 256, %s217, [#allocation3], 64, 64, 4
        $region16: #{tpu_custom_call.1} parent=11 // pred_fallthru
          _
        // Predicated region
        $region17: #{tpu_custom_call.1} parent=11 // pred_check
          %p223 = pneg %p85
        $region18: #{tpu_custom_call.1} parent=11 // pred_check_branch
          %225 = sbr.rel (%p223) target = $region20
        $region19: #{tpu_custom_call.1} parent=11 // pred_region
          _
        $region20: #{tpu_custom_call.1} parent=11 // pred_fallthru
          _
        // Predicated region
        $region21: #{tpu_custom_call.1} parent=11 // pred_check
          %p226 = pneg %p106
        $region22: #{tpu_custom_call.1} parent=11 // pred_check_branch
          %228 = sbr.rel (%p226) target = $region24
        $region23: #{tpu_custom_call.1} parent=11 // pred_region
          _
        $region24: #{tpu_custom_call.1} parent=11 // pred_fallthru
          _
        // Predicated region
        $region25: #{tpu_custom_call.1} parent=11 // pred_check
          %p229 = pneg %p127
        $region26: #{tpu_custom_call.1} parent=11 // pred_check_branch
          %231 = sbr.rel (%p229) target = $region28
        $region27: #{tpu_custom_call.1} parent=11 // pred_region
          _
        $region28: #{tpu_custom_call.1} parent=11 // pred_fallthru
          _
        // Predicated region
        $region29: #{tpu_custom_call.1} parent=11 // pred_check
          %p232 = pneg %p148
        $region30: #{tpu_custom_call.1} parent=11 // pred_check_branch
          %234 = sbr.rel (%p232) target = $region32
        $region31: #{tpu_custom_call.1} parent=11 // pred_region
          _
        $region32: #{tpu_custom_call.1} parent=11 // pred_fallthru
          _
        // Predicated region
        $region33: #{tpu_custom_call.1} parent=11 // pred_check
          %p235 = pneg %p169
        $region34: #{tpu_custom_call.1} parent=11 // pred_check_branch
          %237 = sbr.rel (%p235) target = $region36
        $region35: #{tpu_custom_call.1} parent=11 // pred_region
          _
        $region36: #{tpu_custom_call.1} parent=11 // pred_fallthru
          _
      $region12: #{tpu_custom_call.1} parent=5 // pred_fallthru
        _
      %p238 = scmp.lt.s32.totalorder %s17, 2
      // Predicated region
      $region37: #{tpu_custom_call.1} parent=5 // pred_check
        %p239 = pneg %p238
      $region38: #{tpu_custom_call.1} parent=5 // pred_check_branch
        %241 = sbr.rel (%p239) target = $region40
      $region39: #{tpu_custom_call.1} parent=5 // pred_region
        // Predicated region
        $region41: #{tpu_custom_call.1} parent=39 // pred_check
          %p242 = pneg %p37
        $region42: #{tpu_custom_call.1} parent=39 // pred_check_branch
          %244 = sbr.rel (%p242) target = $region44
        $region43: #{tpu_custom_call.1} parent=39 // pred_region
          %s245 = smul.u32 2, %s17
          %s246 = ssub.s32 3, %s245
          %p247 = scmp.lt.s32.totalorder %s246, 2
          %s248 = scalar_select %p247, %s246, 2
          %s249 = smul.u32 128, %s248
          %p250 = scmp.lt.s32.totalorder %s245, 2
          %s251 = scalar_select %p250, %s245, 2
          %s252 = smul.addr %s251, 8
          %s253 = scalar_lea.vmem %s0, %s252
          %s254 = smul.u32 2, %s17
          %s255 = ssub.s32 3, %s254
          %p256 = scmp.lt.s32.totalorder %s255, 2
          %s257 = scalar_select %p256, %s255, 2
          %s258 = smul.u32 128, %s257
        $region44: #{tpu_custom_call.1} parent=39 // pred_fallthru
          _
      $region40: #{tpu_custom_call.1} parent=5 // pred_fallthru
        _
      %p259 = scmp.le.s32.totalorder 1, %s17
      %p260 = scmp.lt.s32.totalorder %s17, 3
      %p261 = pnand %p259, %p260
      %p262 = pneg %p261
      // Predicated region
      $region45: #{tpu_custom_call.1} parent=5 // pred_check
        _
      $region46: #{tpu_custom_call.1} parent=5 // pred_check_branch
        %264 = sbr.rel (%p261) target = $region48
      $region47: #{tpu_custom_call.1} parent=5 // pred_region
        %s265 = ssub.s32 %s17, 1
        // Predicated region
        $region49: #{tpu_custom_call.1} parent=47 // pred_check
          %p266 = pneg %p64
        $region50: #{tpu_custom_call.1} parent=47 // pred_check_branch
          %268 = sbr.rel (%p266) target = $region52
        $region51: #{tpu_custom_call.1} parent=47 // pred_region
          %269 = dma.done [#allocation3], 256
        $region52: #{tpu_custom_call.1} parent=47 // pred_fallthru
          _
        %s270 = smul.u32 2, %s22
        %s271 = ssub.s32 3, %s270
        %p272 = scmp.lt.s32.totalorder %s271, 2
        %s273 = scalar_select %p272, %s271, 2
        %s274 = smul.u32 128, %s273
        %p275 = scmp.lt.s32.totalorder %s270, 2
        %s276 = scalar_select %p275, %s270, 2
        %s277 = smul.addr %s276, 8
        %s278 = scalar_lea.vmem %s0, %s277
        %p279 = pneg %p43
        %p280 = pneg %p40
        %p281 = pneg %p64
        %p282 = pneg %p61
        %p283 = pneg %p85
        %p284 = pneg %p82
        %p285 = pneg %p106
        %p286 = pneg %p103
        %p287 = pneg %p127
        %p288 = pneg %p124
        %p289 = pneg %p148
        %p290 = pneg %p145
        %p291 = pneg %p169
        %p292 = pneg %p166
        %p293 = pneg %p195
        %p294 = pneg %p192
        %s295 = sand.u32 %s182, 1
        %s296 = scalar_lea.sflag [#allocation4], %s295
        %s297 = sand.u32 %s182, 1
        %s298 = smul.addr %s297, 16
        %s299 = scalar_lea.vmem [#allocation5], %s298
        %s300 = smul.u32 2, %s22
        %s301 = ssub.s32 3, %s300
        %p302 = scmp.lt.s32.totalorder %s301, 2
        %s303 = scalar_select %p302, %s301, 2
        %s304 = smul.u32 128, %s303
        %p305 = scmp.lt.s32.totalorder %s300, 2
        %s306 = scalar_select %p305, %s300, 2
        %s307 = smul.addr %s306, 8
        %s308 = scalar_lea.vmem %s0, %s307
        %s309 = smul.u32 2, %s22
        %s310 = ssub.s32 3, %s309
        %p311 = scmp.lt.s32.totalorder %s310, 2
        %s312 = scalar_select %p311, %s310, 2
        %s313 = smul.u32 128, %s312
        %s314 = smul.u32 2, %s22
        %s315 = ssub.s32 3, %s314
        %p316 = scmp.lt.s32.totalorder %s315, 2
        %s317 = scalar_select %p316, %s315, 2
        %s318 = smul.u32 128, %s317
        %v320 = vld [vmem:[%s308] sm:$0xff]
        %v321 = vld [vmem:[%s308 + $0x8] sm:$0xff]
        %v322 = vpack.c.bf16 %v321, %v320
        %v323 = vld [vmem:[#allocation2] sm:$0xf]
        %v324 = vld [vmem:[#allocation2 + $0x4] sm:$0xf]
        %v325 = vld [vmem:[#allocation2 + $0x8] sm:$0xf]
        %v326 = vld [vmem:[#allocation2 + $0xc] sm:$0xf]
        %v327 = vld [vmem:[%s2] sm:$0x1]
        %v329 = vlaneseq
        %v330 = vshrl.u32 %v329, 7
        %v331 = vsub.s32 0, %v330
        %v332 = vrot.slane %v327, %v331
        %v338 = vunpack.c.l.b16 %v323
        %v339 = vunpack.c.l.b16 %v324
        %v340 = vunpack.c.l.b16 %v325
        %v341 = vunpack.c.l.b16 %v326
        %v342 = vpack.c.b16 %v339, %v338
        %v343 = vpack.c.b16 %v341, %v340
        %vm346 = vcmask 261120
        %v348 = vsel %vm346, %v322, 0
        %350 = vmatprep.subr.bf16.mxu0 0
        %351 = vmatpush1.bf16.msra.mxu0 %v342
        %352 = vmatprep.subr.bf16.mxu0 0
        %353 = vmatpush1.bf16.msra.mxu0 %v343
        %354 = vmatprep.subr.bf16.mxu0 0
        %355 = vmatpush1.bf16.msra.mxu0 0
        %356 = vmatprep.subr.bf16.mxu0 0
        %357 = vmatpush1.bf16.msra.mxu0 0
        %358 = vmatprep.subr.bf16.mxu0 0
        %359 = vmatpush1.bf16.msra.mxu0 0
        %360 = vmatprep.subr.bf16.mxu0 0
        %361 = vmatpush1.bf16.msra.mxu0 0
        %362 = vmatprep.subr.bf16.mxu0 0
        %363 = vmatpush1.bf16.msra.mxu0 0
        %364 = vmatprep.subr.bf16.mxu0 0
        %365 = vmatpush1.bf16.msra.mxu0 0
        %366 = vmatprep.subr.bf16.mxu0 0
        %367 = vmatpush1.bf16.msra.mxu0 0
        %368 = vmatprep.subr.bf16.mxu0 0
        %369 = vmatpush1.bf16.msra.mxu0 0
        %370 = vmatprep.subr.bf16.mxu0 0
        %371 = vmatpush1.bf16.msra.mxu0 0
        %372 = vmatprep.subr.bf16.mxu0 0
        %373 = vmatpush1.bf16.msra.mxu0 0
        %374 = vmatprep.subr.bf16.mxu0 0
        %375 = vmatpush1.bf16.msra.mxu0 0
        %376 = vmatprep.subr.bf16.mxu0 0
        %377 = vmatpush1.bf16.msra.mxu0 0
        %378 = vmatprep.subr.bf16.mxu0 0
        %379 = vmatpush1.bf16.msra.mxu0 0
        %380 = vmatprep.subr.bf16.mxu0 0
        %381 = vmatpush1.bf16.msra.mxu0 0
        %382 = vmatprep.mubr.bf16.mxu0 0
        %383 = vmatmul.mubr.bf16.gmra.mrb[0].mxu0 %v348
        %v384 = vpop.f32.mrb[0].mxu0
        %v385 = vadd.f32 %v332, %v384
        %v386 = vpop.f32.mrb[0].mxu0
        %v387 = vpop.f32.mrb[0].mxu0
        %v388 = vadd.f32 %v332, %v387
        %v389 = vpop.f32.mrb[0].mxu0
        %390 = vdwg.mxu0
        %v391 = vmax.f32 %v385, 0.0
        %v392 = vmax.f32 %v388, 0.0
        %v393 = vpack.c.bf16 %v392, %v391
        %v394 = vld [vmem:[%s3] sm:$0xf]
        %v395 = vld [vmem:[%s3 + $0x4] sm:$0xf]
        %v396 = vld [vmem:[%s3 + $0x8] sm:$0xf]
        %v397 = vld [vmem:[%s3 + $0xc] sm:$0xf]
        %v398 = vld [vmem:[%s3 + $0x10] sm:$0xf]
        %v399 = vld [vmem:[%s3 + $0x14] sm:$0xf]
        %v400 = vld [vmem:[%s3 + $0x18] sm:$0xf]
        %v401 = vld [vmem:[%s3 + $0x1c] sm:$0xf]
        %v402 = vld [vmem:[%s4] sm:$0x1]
        %v404 = vlaneseq
        %v405 = vshrl.u32 %v404, 7
        %v406 = vsub.s32 0, %v405
        %v407 = vrot.slane %v402, %v406
        %v417 = vunpack.c.l.b16 %v394
        %v418 = vunpack.c.l.b16 %v395
        %v419 = vunpack.c.l.b16 %v396
        %v420 = vunpack.c.l.b16 %v397
        %v421 = vunpack.c.l.b16 %v398
        %v422 = vunpack.c.l.b16 %v399
        %v423 = vunpack.c.l.b16 %v400
        %v424 = vunpack.c.l.b16 %v401
        %v425 = vpack.c.b16 %v418, %v417
        %v426 = vpack.c.b16 %v420, %v419
        %v427 = vpack.c.b16 %v422, %v421
        %v428 = vpack.c.b16 %v424, %v423
        %vm433 = vcmask 523264
        %v435 = vsel %vm433, %v393, 0
        %437 = vmatprep.subr.bf16.mxu0 0
        %438 = vmatpush1.bf16.msra.mxu0 %v425
        %439 = vmatprep.subr.bf16.mxu0 0
        %440 = vmatpush1.bf16.msra.mxu0 %v426
        %441 = vmatprep.subr.bf16.mxu0 0
        %442 = vmatpush1.bf16.msra.mxu0 %v427
        %443 = vmatprep.subr.bf16.mxu0 0
        %444 = vmatpush1.bf16.msra.mxu0 %v428
        %445 = vmatprep.subr.bf16.mxu0 0
        %446 = vmatpush1.bf16.msra.mxu0 0
        %447 = vmatprep.subr.bf16.mxu0 0
        %448 = vmatpush1.bf16.msra.mxu0 0
        %449 = vmatprep.subr.bf16.mxu0 0
        %450 = vmatpush1.bf16.msra.mxu0 0
        %451 = vmatprep.subr.bf16.mxu0 0
        %452 = vmatpush1.bf16.msra.mxu0 0
        %453 = vmatprep.subr.bf16.mxu0 0
        %454 = vmatpush1.bf16.msra.mxu0 0
        %455 = vmatprep.subr.bf16.mxu0 0
        %456 = vmatpush1.bf16.msra.mxu0 0
        %457 = vmatprep.subr.bf16.mxu0 0
        %458 = vmatpush1.bf16.msra.mxu0 0
        %459 = vmatprep.subr.bf16.mxu0 0
        %460 = vmatpush1.bf16.msra.mxu0 0
        %461 = vmatprep.subr.bf16.mxu0 0
        %462 = vmatpush1.bf16.msra.mxu0 0
        %463 = vmatprep.subr.bf16.mxu0 0
        %464 = vmatpush1.bf16.msra.mxu0 0
        %465 = vmatprep.subr.bf16.mxu0 0
        %466 = vmatpush1.bf16.msra.mxu0 0
        %467 = vmatprep.subr.bf16.mxu0 0
        %468 = vmatpush1.bf16.msra.mxu0 0
        %469 = vmatprep.mubr.bf16.mxu0 0
        %470 = vmatmul.mubr.bf16.gmra.mrb[0].mxu0 %v435
        %v471 = vpop.f32.mrb[0].mxu0
        %v472 = vadd.f32 %v407, %v471
        %v473 = vpop.f32.mrb[0].mxu0
        %v474 = vpop.f32.mrb[0].mxu0
        %v475 = vadd.f32 %v407, %v474
        %v476 = vpop.f32.mrb[0].mxu0
        %477 = vdwg.mxu0
        %v478 = vmax.f32 %v472, 0.0
        %v479 = vmax.f32 %v475, 0.0
        %v480 = vpack.c.bf16 %v479, %v478
        %v481 = vld [vmem:[%s5] sm:$0xf]
        %v482 = vld [vmem:[%s5 + $0x4] sm:$0xf]
        %v483 = vld [vmem:[%s5 + $0x8] sm:$0xf]
        %v484 = vld [vmem:[%s5 + $0xc] sm:$0xf]
        %v485 = vld [vmem:[%s5 + $0x10] sm:$0xf]
        %v486 = vld [vmem:[%s5 + $0x14] sm:$0xf]
        %v487 = vld [vmem:[%s5 + $0x18] sm:$0xf]
        %v488 = vld [vmem:[%s5 + $0x1c] sm:$0xf]
        %v497 = vunpack.c.l.b16 %v481
        %v498 = vunpack.c.l.b16 %v482
        %v499 = vunpack.c.l.b16 %v483
        %v500 = vunpack.c.l.b16 %v484
        %v501 = vunpack.c.l.b16 %v485
        %v502 = vunpack.c.l.b16 %v486
        %v503 = vunpack.c.l.b16 %v487
        %v504 = vunpack.c.l.b16 %v488
        %v505 = vpack.c.b16 %v498, %v497
        %v506 = vpack.c.b16 %v500, %v499
        %v507 = vpack.c.b16 %v502, %v501
        %v508 = vpack.c.b16 %v504, %v503
        %v514 = vsel %vm433, %v480, 0
        %516 = vmatprep.subr.bf16.mxu0 0
        %517 = vmatpush1.bf16.msra.mxu0 %v505
        %518 = vmatprep.subr.bf16.mxu0 0
        %519 = vmatpush1.bf16.msra.mxu0 %v506
        %520 = vmatprep.subr.bf16.mxu0 0
        %521 = vmatpush1.bf16.msra.mxu0 %v507
        %522 = vmatprep.subr.bf16.mxu0 0
        %523 = vmatpush1.bf16.msra.mxu0 %v508
        %524 = vmatprep.subr.bf16.mxu0 0
        %525 = vmatpush1.bf16.msra.mxu0 0
        %526 = vmatprep.subr.bf16.mxu0 0
        %527 = vmatpush1.bf16.msra.mxu0 0
        %528 = vmatprep.subr.bf16.mxu0 0
        %529 = vmatpush1.bf16.msra.mxu0 0
        %530 = vmatprep.subr.bf16.mxu0 0
        %531 = vmatpush1.bf16.msra.mxu0 0
        %532 = vmatprep.subr.bf16.mxu0 0
        %533 = vmatpush1.bf16.msra.mxu0 0
        %534 = vmatprep.subr.bf16.mxu0 0
        %535 = vmatpush1.bf16.msra.mxu0 0
        %536 = vmatprep.subr.bf16.mxu0 0
        %537 = vmatpush1.bf16.msra.mxu0 0
        %538 = vmatprep.subr.bf16.mxu0 0
        %539 = vmatpush1.bf16.msra.mxu0 0
        %540 = vmatprep.subr.bf16.mxu0 0
        %541 = vmatpush1.bf16.msra.mxu0 0
        %542 = vmatprep.subr.bf16.mxu0 0
        %543 = vmatpush1.bf16.msra.mxu0 0
        %544 = vmatprep.subr.bf16.mxu0 0
        %545 = vmatpush1.bf16.msra.mxu0 0
        %546 = vmatprep.subr.bf16.mxu0 0
        %547 = vmatpush1.bf16.msra.mxu0 0
        %548 = vmatprep.mubr.bf16.mxu0 0
        %549 = vmatmul.mubr.bf16.gmra.mrb[0].mxu0 %v514
        %v550 = vpop.f32.mrb[0].mxu0
        %v551 = vadd.f32 0.0, %v550
        %v552 = vpop.f32.mrb[0].mxu0
        %v553 = vpop.f32.mrb[0].mxu0
        %v554 = vadd.f32 0.0, %v553
        %v555 = vpop.f32.mrb[0].mxu0
        %556 = vdwg.mxu0
        %v557 = vadd.f32 %v320, %v551
        %v558 = vadd.f32 %v321, %v554
        %v559 = vld [vmem:[%s6] sm:$0x1]
        %v561 = vlaneseq
        %v562 = vshrl.u32 %v561, 7
        %v563 = vsub.s32 0, %v562
        %v564 = vrot.slane %v559, %v563
        %v566 = vadd.f32 %v557, %v564
        %v567 = vadd.f32 %v558, %v564
        %568 = vst.msk [vmem:[%s299] sm:$0xff] %vm346, %v566
        %569 = vst.msk [vmem:[%s299 + $0x8] sm:$0xff] %vm346, %v567
        %s570 = sand.u32 %s182, 1
        %s571 = scalar_lea.sflag [#allocation4], %s570
        %s572 = sand.u32 %s182, 1
        %s573 = smul.addr %s572, 16
        %s574 = scalar_lea.vmem [#allocation5], %s573
        // Predicated region
        $region53: #{tpu_custom_call.1} parent=47 // pred_check
          %p575 = pneg %p192
        $region54: #{tpu_custom_call.1} parent=47 // pred_check_branch
          %577 = sbr.rel (%p575) target = $region56
        $region55: #{tpu_custom_call.1} parent=47 // pred_region
          %s578 = smul.u32 2, %s22
          %s579 = ssub.s32 3, %s578
          %p580 = scmp.lt.s32.totalorder %s579, 2
          %s581 = scalar_select %p580, %s579, 2
          %s582 = smul.u32 128, %s581
          %s584 = ssub.s32 256, %s582
          %585 = vsyncadd %s571, %s584
          %p586 = scmp.ne.s32.totalorder 0, %s582
          %s587 = smul.addr %s578, 128
          %s588 = scalar_lea.hbm %s7, %s587
          %s589 = smul.u32 8, %s581
          %s590 = sshll.u32 %s574, 4
          %s591 = int_to_ptr.vmem [resolvable:$true] %s590
          %s592 = sshll.u32 %s589, 4
          %596 = dma.vmem_to_hbm [thread:$0]  (%p586), %s591, %s592, %s588, %s571, 128, 128, 8
        $region56: #{tpu_custom_call.1} parent=47 // pred_fallthru
          _
      $region48: #{tpu_custom_call.1} parent=5 // pred_fallthru
        _
      %p597 = scmp.le.s32.totalorder 2, %s17
      // Predicated region
      $region57: #{tpu_custom_call.1} parent=5 // pred_check
        %p598 = pneg %p597
      $region58: #{tpu_custom_call.1} parent=5 // pred_check_branch
        %600 = sbr.rel (%p598) target = $region60
      $region59: #{tpu_custom_call.1} parent=5 // pred_region
        %s601 = ssub.s32 %s17, 2
        // Predicated region
        $region61: #{tpu_custom_call.1} parent=59 // pred_check
          %p602 = pneg %p198
        $region62: #{tpu_custom_call.1} parent=59 // pred_check_branch
          %604 = sbr.rel (%p602) target = $region64
        $region63: #{tpu_custom_call.1} parent=59 // pred_region
          %s605 = sand.u32 %s183, 1
          %s606 = scalar_lea.sflag [#allocation4], %s605
          %s607 = sand.u32 %s183, 1
          %s608 = smul.addr %s607, 16
          %s609 = scalar_lea.vmem [#allocation5], %s608
          %610 = dma.done %s606, 256
        $region64: #{tpu_custom_call.1} parent=59 // pred_fallthru
          _
      $region60: #{tpu_custom_call.1} parent=5 // pred_fallthru
        _
    $region6: #{tpu_custom_call.1} parent=1 // loop_footer
      %s21 = sadd.s32 1, %s17
    $region7: #{tpu_custom_call.1} parent=1 // loop_footer_branch
      %16 = sbr.rel target = $region3
    $region8: #{tpu_custom_call.1} parent=1 // loop_exit
      _
    %611 = vsyncpa [#allocation3], 1
    %s612 = scalar_lea.sflag [#allocation3], 1
    %613 = vsyncpa %s612, 1
    %614 = vsyncpa [#allocation4], 1
    %s615 = scalar_lea.sflag [#allocation4], 1
    %616 = vsyncpa %s615, 1

</llo_original>
